<compile_context>
chip_gen: v7x
topology: tpu7x:2x2x1
jax: 0.10.0
libtpu: 0.0.40
codegen_flags: <defaults>
</compile_context>

<pallas_src>
import jax
import jax.numpy as jnp
from jax.experimental import pallas as pl
from jax.experimental.pallas import tpu as pltpu


def critic_kernel(s_ref, a_ref, w1s_ref, w1a_ref, b1_ref, w2_ref, b2_ref,
                  w3t_ref, b3_ref, q_ref):
    # fc1: two dots (state part + action part) replace the concat'd single dot.
    h1 = jnp.dot(s_ref[...], w1s_ref[...], preferred_element_type=jnp.float32)
    h1 = h1 + jnp.dot(a_ref[...], w1a_ref[...],
                      preferred_element_type=jnp.float32)
    h1 = jnp.maximum(h1 + b1_ref[...], 0.0)                          # [TB, 128]

    # fc2
    h2 = jnp.dot(h1, w2_ref[...], preferred_element_type=jnp.float32)
    h2 = jnp.maximum(h2 + b2_ref[...], 0.0)                          # [TB, 128]

    # fc3 (out_features == 1): lane reduction on the VPU/XLU instead of an
    # MXU matmul that would waste 127/255 columns.
    q = jnp.sum(h2 * w3t_ref[...], axis=-1, keepdims=True)           # [TB, 1]
    q_ref[...] = q + b3_ref[0, 0]


def _round_up(n, m):
    return ((n + m - 1) // m) * m


def critic_forward(state, action, params, *, max_batch_tile=512):
    """state: [B, state_dim], action: [B, action_dim] -> q: [B, 1]."""
    w1, b1, w2, b2, w3, b3 = params
    state = state.astype(jnp.float32)
    action = action.astype(jnp.float32)

    B, S = state.shape
    A = action.shape[1]
    H = w1.shape[1]

    # One-time wrapper-side weight massaging (these are tiny, constant-folded
    # under jit): split fc1 weights to avoid the activation concat, and turn
    # fc3's [H, 1] column into a [1, H] row for the in-kernel lane reduction.
    w1_s = w1[:S]                      # [S, H]
    w1_a = w1[S:]                      # [A, H]
    w3t = w3.T                         # [1, H]

    # Batch tiling: TB multiple of 8 (f32 sublane), capped so activation tiles
    # stay small (fits comfortably even on v7x's 64 MiB VMEM). Pad B to a
    # multiple of TB; padded rows are dropped after the call.
    TB = min(max_batch_tile, _round_up(B, 8))
    Bp = _round_up(B, TB)
    if Bp != B:
        pad = Bp - B
        state = jnp.pad(state, ((0, pad), (0, 0)))
        action = jnp.pad(action, ((0, pad), (0, 0)))

    grid = (Bp // TB,)

    def resident(shape):
        # Whole-array block, same block index every grid step -> stays in VMEM.
        return pl.BlockSpec(shape, lambda i: (0, 0))

    q = pl.pallas_call(
        critic_kernel,
        out_shape=jax.ShapeDtypeStruct((Bp, 1), jnp.float32),
        grid=grid,
        in_specs=[
            pl.BlockSpec((TB, S), lambda i: (i, 0)),      # state tile
            pl.BlockSpec((TB, A), lambda i: (i, 0)),      # action tile
            resident((S, H)),                             # w1_s
            resident((A, H)),                             # w1_a
            resident((1, H)),                             # b1
            resident((H, H)),                             # w2
            resident((1, H)),                             # b2
            resident((1, H)),                             # w3^T
            pl.BlockSpec(memory_space=pltpu.SMEM),        # b3 scalar
        ],
        out_specs=pl.BlockSpec((TB, 1), lambda i: (i, 0)),
        compiler_params=pltpu.CompilerParams(
            dimension_semantics=("parallel",),            # 2x on v7x megacore
        ),
    )(state, action, w1_s, w1_a, b1, w2, b2, w3t, b3)

    return q[:B]


def init_critic_params(key, state_dim, action_dim, hidden=128):
    """Deterministic synthetic init (uniform, PyTorch-Linear-style bounds)."""
    def linear(key, fan_in, fan_out):
        kw, kb = jax.random.split(key)
        bound = 1.0 / jnp.sqrt(jnp.float32(fan_in))
        w = jax.random.uniform(kw, (fan_in, fan_out), jnp.float32, -bound, bound)
        b = jax.random.uniform(kb, (1, fan_out), jnp.float32, -bound, bound)
        return w, b

    k1, k2, k3 = jax.random.split(key, 3)
    w1, b1 = linear(k1, state_dim + action_dim, hidden)
    w2, b2 = linear(k2, hidden, hidden)
    w3, b3 = linear(k3, hidden, 1)
    return (w1, b1, w2, b2, w3, b3)


def critic_reference(state, action, params):
    w1, b1, w2, b2, w3, b3 = params
    x = jnp.concatenate([state, action], axis=1)
    x = jnp.maximum(x @ w1 + b1, 0.0)
    x = jnp.maximum(x @ w2 + b2, 0.0)
    return x @ w3 + b3


if __name__ == "__main__":
    B, STATE_DIM, ACTION_DIM = 2, 16, 4

    key = jax.random.PRNGKey(0)
    k_state, k_action, k_params = jax.random.split(key, 3)

    state = jax.random.normal(k_state, (B, STATE_DIM), jnp.float32)
    action = jax.random.normal(k_action, (B, ACTION_DIM), jnp.float32)
    params = init_critic_params(k_params, STATE_DIM, ACTION_DIM)

    q = critic_forward(state, action, params)
    q = jax.block_until_ready(q)

    q_ref = critic_reference(state, action, params)
    assert q.shape == (B, 1), q.shape
    assert jnp.allclose(q, q_ref, atol=1e-5, rtol=1e-5), (q, q_ref)

    print("KERNEL_OK")
</pallas_src>

<mosaic_0001>
module attributes {stable_mosaic.version = 11 : i64} {
  func.func @critic_kernel(%arg0: i32, %arg1: memref<8x16xf32, #tpu.memory_space<vmem>>, %arg2: memref<8x4xf32, #tpu.memory_space<vmem>>, %arg3: memref<16x128xf32, #tpu.memory_space<vmem>>, %arg4: memref<4x128xf32, #tpu.memory_space<vmem>>, %arg5: memref<1x128xf32, #tpu.memory_space<vmem>>, %arg6: memref<128x128xf32, #tpu.memory_space<vmem>>, %arg7: memref<1x128xf32, #tpu.memory_space<vmem>>, %arg8: memref<1x128xf32, #tpu.memory_space<vmem>>, %arg9: memref<1x1xf32, #tpu.memory_space<smem>>, %arg10: memref<8x1xf32, #tpu.memory_space<vmem>>) attributes {dimension_semantics = [#tpu.dimension_semantics<parallel>], iteration_bounds = array<i64: 1>, scalar_prefetch = 0 : i64, scratch_operands = 0 : i64, tpu.core_type = #tpu.core_type<tc>, window_params = [{transform_indices = @transform_0, window_bounds = array<i64: 8, 16>}, {transform_indices = @transform_1, window_bounds = array<i64: 8, 4>}, {pipeline_mode = #tpu.pipeline_mode<synchronous>, transform_indices = @transform_2, window_bounds = array<i64: 16, 128>}, {pipeline_mode = #tpu.pipeline_mode<synchronous>, transform_indices = @transform_3, window_bounds = array<i64: 4, 128>}, {pipeline_mode = #tpu.pipeline_mode<synchronous>, transform_indices = @transform_4, window_bounds = array<i64: 1, 128>}, {pipeline_mode = #tpu.pipeline_mode<synchronous>, transform_indices = @transform_5, window_bounds = array<i64: 128, 128>}, {pipeline_mode = #tpu.pipeline_mode<synchronous>, transform_indices = @transform_6, window_bounds = array<i64: 1, 128>}, {pipeline_mode = #tpu.pipeline_mode<synchronous>, transform_indices = @transform_7, window_bounds = array<i64: 1, 128>}, {transform_indices = @transform_8, window_bounds = array<i64: 1, 1>}, {transform_indices = @transform_9, window_bounds = array<i64: 8, 1>}]} {
    %c0 = arith.constant 0 : index
    %c0_0 = arith.constant 0 : index
    %0 = vector.load %arg1[%c0, %c0_0] : memref<8x16xf32, #tpu.memory_space<vmem>>, vector<8x16xf32>
    %c0_1 = arith.constant 0 : index
    %c0_2 = arith.constant 0 : index
    %1 = vector.load %arg3[%c0_1, %c0_2] : memref<16x128xf32, #tpu.memory_space<vmem>>, vector<16x128xf32>
    %cst = arith.constant dense<0.000000e+00> : vector<8x128xf32>
    %2 = tpu.matmul %0, %1, %cst {dimension_numbers = #tpu.dot_dimension_numbers<[1], [0], [0], [1], [0, 0, 1, 1], [], []>} : vector<8x16xf32>, vector<16x128xf32>, vector<8x128xf32> -> vector<8x128xf32>
    %c0_3 = arith.constant 0 : index
    %c0_4 = arith.constant 0 : index
    %3 = vector.load %arg2[%c0_3, %c0_4] : memref<8x4xf32, #tpu.memory_space<vmem>>, vector<8x4xf32>
    %c0_5 = arith.constant 0 : index
    %c0_6 = arith.constant 0 : index
    %4 = vector.load %arg4[%c0_5, %c0_6] : memref<4x128xf32, #tpu.memory_space<vmem>>, vector<4x128xf32>
    %cst_7 = arith.constant dense<0.000000e+00> : vector<8x128xf32>
    %5 = tpu.matmul %3, %4, %cst_7 {dimension_numbers = #tpu.dot_dimension_numbers<[1], [0], [0], [1], [0, 0, 1, 1], [], []>} : vector<8x4xf32>, vector<4x128xf32>, vector<8x128xf32> -> vector<8x128xf32>
    %6 = arith.addf %2, %5 : vector<8x128xf32>
    %c0_8 = arith.constant 0 : index
    %c0_9 = arith.constant 0 : index
    %7 = vector.load %arg5[%c0_8, %c0_9] : memref<1x128xf32, #tpu.memory_space<vmem>>, vector<1x128xf32>
    %8 = vector.broadcast %7 : vector<1x128xf32> to vector<8x128xf32>
    %9 = arith.addf %6, %8 : vector<8x128xf32>
    %cst_10 = arith.constant 0.000000e+00 : f32
    %10 = vector.broadcast %cst_10 : f32 to vector<8x128xf32>
    %11 = arith.maximumf %9, %10 : vector<8x128xf32>
    %c0_11 = arith.constant 0 : index
    %c0_12 = arith.constant 0 : index
    %12 = vector.load %arg6[%c0_11, %c0_12] : memref<128x128xf32, #tpu.memory_space<vmem>>, vector<128x128xf32>
    %cst_13 = arith.constant dense<0.000000e+00> : vector<8x128xf32>
    %13 = tpu.matmul %11, %12, %cst_13 {dimension_numbers = #tpu.dot_dimension_numbers<[1], [0], [0], [1], [0, 0, 1, 1], [], []>} : vector<8x128xf32>, vector<128x128xf32>, vector<8x128xf32> -> vector<8x128xf32>
    %c0_14 = arith.constant 0 : index
    %c0_15 = arith.constant 0 : index
    %14 = vector.load %arg7[%c0_14, %c0_15] : memref<1x128xf32, #tpu.memory_space<vmem>>, vector<1x128xf32>
    %15 = vector.broadcast %14 : vector<1x128xf32> to vector<8x128xf32>
    %16 = arith.addf %13, %15 : vector<8x128xf32>
    %cst_16 = arith.constant 0.000000e+00 : f32
    %17 = vector.broadcast %cst_16 : f32 to vector<8x128xf32>
    %18 = arith.maximumf %16, %17 : vector<8x128xf32>
    %c0_17 = arith.constant 0 : index
    %c0_18 = arith.constant 0 : index
    %19 = vector.load %arg8[%c0_17, %c0_18] : memref<1x128xf32, #tpu.memory_space<vmem>>, vector<1x128xf32>
    %20 = vector.broadcast %19 : vector<1x128xf32> to vector<8x128xf32>
    %21 = arith.mulf %18, %20 : vector<8x128xf32>
    %cst_19 = arith.constant dense<0.000000e+00> : vector<8xf32>
    %22 = vector.multi_reduction <add>, %21, %cst_19 [1] : vector<8x128xf32> to vector<8xf32>
    %23 = vector.shape_cast %22 : vector<8xf32> to vector<8x1xf32>
    %c0_20 = arith.constant 0 : index
    %c0_21 = arith.constant 0 : index
    %24 = memref.load %arg9[%c0_20, %c0_21] : memref<1x1xf32, #tpu.memory_space<smem>>
    %25 = vector.broadcast %24 : f32 to vector<8x1xf32>
    %26 = arith.addf %23, %25 : vector<8x1xf32>
    %c0_22 = arith.constant 0 : index
    %c0_23 = arith.constant 0 : index
    %27 = vector.load %arg10[%c0_22, %c0_23] : memref<8x1xf32, #tpu.memory_space<vmem>>, vector<8x1xf32>
    tpu.vector_store %arg10[%c0_22, %c0_23], %26 {strides = array<i32>} : memref<8x1xf32, #tpu.memory_space<vmem>>, vector<8x1xf32>,
    return
  }
  func.func @transform_0(%arg0: i32) -> (i32, i32) {
    %c0_i32 = arith.constant 0 : i32
    %c0_i32_0 = arith.constant 0 : i32
    return %arg0, %c0_i32 : i32, i32
  }
  func.func @transform_1(%arg0: i32) -> (i32, i32) {
    %c0_i32 = arith.constant 0 : i32
    %c0_i32_0 = arith.constant 0 : i32
    return %arg0, %c0_i32 : i32, i32
  }
  func.func @transform_2(%arg0: i32) -> (i32, i32) {
    %c0_i32 = arith.constant 0 : i32
    %c0_i32_0 = arith.constant 0 : i32
    %c0_i32_1 = arith.constant 0 : i32
    return %c0_i32, %c0_i32_0 : i32, i32
  }
  func.func @transform_3(%arg0: i32) -> (i32, i32) {
    %c0_i32 = arith.constant 0 : i32
    %c0_i32_0 = arith.constant 0 : i32
    %c0_i32_1 = arith.constant 0 : i32
    return %c0_i32, %c0_i32_0 : i32, i32
  }
  func.func @transform_4(%arg0: i32) -> (i32, i32) {
    %c0_i32 = arith.constant 0 : i32
    %c0_i32_0 = arith.constant 0 : i32
    %c0_i32_1 = arith.constant 0 : i32
    return %c0_i32, %c0_i32_0 : i32, i32
  }
  func.func @transform_5(%arg0: i32) -> (i32, i32) {
    %c0_i32 = arith.constant 0 : i32
    %c0_i32_0 = arith.constant 0 : i32
    %c0_i32_1 = arith.constant 0 : i32
    return %c0_i32, %c0_i32_0 : i32, i32
  }
  func.func @transform_6(%arg0: i32) -> (i32, i32) {
    %c0_i32 = arith.constant 0 : i32
    %c0_i32_0 = arith.constant 0 : i32
    %c0_i32_1 = arith.constant 0 : i32
    return %c0_i32, %c0_i32_0 : i32, i32
  }
  func.func @transform_7(%arg0: i32) -> (i32, i32) {
    %c0_i32 = arith.constant 0 : i32
    %c0_i32_0 = arith.constant 0 : i32
    %c0_i32_1 = arith.constant 0 : i32
    return %c0_i32, %c0_i32_0 : i32, i32
  }
  func.func @transform_8(%arg0: i32) -> (i32, i32) {
    %c0_i32 = arith.constant 0 : i32
    %c0_i32_0 = arith.constant 0 : i32
    %c0_i32_1 = arith.constant 0 : i32
    return %c0_i32, %c0_i32_0 : i32, i32
  }
  func.func @transform_9(%arg0: i32) -> (i32, i32) {
    %c0_i32 = arith.constant 0 : i32
    %c0_i32_0 = arith.constant 0 : i32
    return %arg0, %c0_i32 : i32, i32
  }
}

</mosaic_0001>

<llo_original>
// kernel: tpu_custom_call.1
$region0: #{tpu_custom_call.1}
  #allocation0 [shape = 'u32[]', space=smem, size = 0x4, offset = 0x4, fixed_abs, tag = 'smem constant byte address 0x4 - core index']
  #allocation1 [shape = 'u32[144,128]{1,0:T(1,128)}', space=vmem, size = 0x12000, scoped, tag = 'internal scratch']
  #allocation2 [shape = 'f32[1,1]{1,0:T(1,128)S(6)}', space=smem, size = 0x200, scoped, tag = 'scoped memory for tpu_custom_call.1']
  %s0 = inlined_call_operand.hbm [shape: f32[8,16], index: 0, kind: input, shape index: {}]
  %s1 = inlined_call_operand.vmem [shape: f32[8,4], index: 1, kind: input, shape index: {}]
  %s2 = inlined_call_operand.vmem [shape: f32[16,128], index: 2, kind: input, shape index: {}]
  %s3 = inlined_call_operand.vmem [shape: f32[4,128], index: 3, kind: input, shape index: {}]
  %s4 = inlined_call_operand.vmem [shape: f32[1,128], index: 4, kind: input, shape index: {}]
  %s5 = inlined_call_operand.hbm [shape: f32[128,128], index: 5, kind: input, shape index: {}]
  %s6 = inlined_call_operand.vmem [shape: f32[1,128], index: 6, kind: input, shape index: {}]
  %s7 = inlined_call_operand.vmem [shape: f32[1,128], index: 7, kind: input, shape index: {}]
  %s8 = inlined_call_operand.<no memory space> [shape: f32[1,1], index: 8, kind: input, shape index: {}]
  %s9 = inlined_call_operand.vmem [shape: f32[8,1], index: 9, kind: output, shape index: {}]
  %s10 = sld [smem:[#allocation0]]
  $region54: #{tpu_custom_call.1} parent=0
    _
  %s12 = ssub.s32 1, %s10
  %s13 = scalar_select 0, %s12, %s10
  %14 = sst [smem:[#allocation2]] %s8
  $region1: #{tpu_custom_call.1} parent=0
    #allocation3 [shape = 'u8[4096]{0}', space=vmem, size = 0x1000, scoped, tag = 'input window, operand 0, single buffered']
    #allocation4 [shape = 's32[1]{0}', space=sflag, size = 0x4, scoped, tag = 'scoped memory for tpu_custom_call.1']
    #allocation5 [shape = 'u8[65536]{0}', space=vmem, size = 0x10000, scoped, tag = 'input window, operand 5, single buffered']
    #allocation6 [shape = 's32[1]{0}', space=sflag, size = 0x4, scoped, tag = 'scoped memory for tpu_custom_call.1']
    %15 = vsyncpa [#allocation4], 0
    %16 = vsyncpa [#allocation6], 0
    // Predicated region
    $region2: #{tpu_custom_call.1} parent=1 // pred_check
      _
    $region3: #{tpu_custom_call.1} parent=1 // pred_check_branch
      %18 = sbr.rel (0) target = $region5
    $region4: #{tpu_custom_call.1} parent=1 // pred_region
      %s20 = ssub.s32 128, 128
      %21 = vsyncadd [#allocation4], %s20
      %s23 = sshll.u32 [#allocation3], 4
      %s24 = int_to_ptr.vmem [resolvable:$true] %s23
      %26 = dma.hbm_to_vmem [thread:$0]  %s0, 128, %s24, [#allocation4]
    $region5: #{tpu_custom_call.1} parent=1 // pred_fallthru
      _
    // Predicated region
    $region6: #{tpu_custom_call.1} parent=1 // pred_check
      _
    $region7: #{tpu_custom_call.1} parent=1 // pred_check_branch
      %28 = sbr.rel (0) target = $region9
    $region8: #{tpu_custom_call.1} parent=1 // pred_region
      _
    $region9: #{tpu_custom_call.1} parent=1 // pred_fallthru
      _
    // Predicated region
    $region10: #{tpu_custom_call.1} parent=1 // pred_check
      _
    $region11: #{tpu_custom_call.1} parent=1 // pred_check_branch
      %30 = sbr.rel (0) target = $region13
    $region12: #{tpu_custom_call.1} parent=1 // pred_region
      _
    $region13: #{tpu_custom_call.1} parent=1 // pred_fallthru
      _
    // Predicated region
    $region14: #{tpu_custom_call.1} parent=1 // pred_check
      _
    $region15: #{tpu_custom_call.1} parent=1 // pred_check_branch
      %32 = sbr.rel (0) target = $region17
    $region16: #{tpu_custom_call.1} parent=1 // pred_region
      _
    $region17: #{tpu_custom_call.1} parent=1 // pred_fallthru
      _
    // Predicated region
    $region18: #{tpu_custom_call.1} parent=1 // pred_check
      _
    $region19: #{tpu_custom_call.1} parent=1 // pred_check_branch
      %34 = sbr.rel (0) target = $region21
    $region20: #{tpu_custom_call.1} parent=1 // pred_region
      _
    $region21: #{tpu_custom_call.1} parent=1 // pred_fallthru
      _
    // Predicated region
    $region22: #{tpu_custom_call.1} parent=1 // pred_check
      _
    $region23: #{tpu_custom_call.1} parent=1 // pred_check_branch
      %36 = sbr.rel (0) target = $region25
    $region24: #{tpu_custom_call.1} parent=1 // pred_region
      %s38 = ssub.s32 2048, 2048
      %39 = vsyncadd [#allocation6], %s38
      %s40 = sshll.u32 [#allocation5], 4
      %s41 = int_to_ptr.vmem [resolvable:$true] %s40
      %46 = dma.hbm_to_vmem [thread:$0]  %s5, 2048, %s41, [#allocation6], 128, 128, 8
    $region25: #{tpu_custom_call.1} parent=1 // pred_fallthru
      _
    // Predicated region
    $region26: #{tpu_custom_call.1} parent=1 // pred_check
      _
    $region27: #{tpu_custom_call.1} parent=1 // pred_check_branch
      %48 = sbr.rel (0) target = $region29
    $region28: #{tpu_custom_call.1} parent=1 // pred_region
      _
    $region29: #{tpu_custom_call.1} parent=1 // pred_fallthru
      _
    // Predicated region
    $region30: #{tpu_custom_call.1} parent=1 // pred_check
      _
    $region31: #{tpu_custom_call.1} parent=1 // pred_check_branch
      %50 = sbr.rel (0) target = $region33
    $region32: #{tpu_custom_call.1} parent=1 // pred_region
      _
    $region33: #{tpu_custom_call.1} parent=1 // pred_fallthru
      _
    // Predicated region
    $region34: #{tpu_custom_call.1} parent=1 // pred_check
      _
    $region35: #{tpu_custom_call.1} parent=1 // pred_check_branch
      %52 = sbr.rel (0) target = $region37
    $region36: #{tpu_custom_call.1} parent=1 // pred_region
      _
    $region37: #{tpu_custom_call.1} parent=1 // pred_fallthru
      _
    // Predicated region
    $region38: #{tpu_custom_call.1} parent=1 // pred_check
      _
    $region39: #{tpu_custom_call.1} parent=1 // pred_check_branch
      %54 = sbr.rel (0) target = $region41
    $region40: #{tpu_custom_call.1} parent=1 // pred_region
      %55 = dma.done [#allocation4], 128
    $region41: #{tpu_custom_call.1} parent=1 // pred_fallthru
      _
    // Predicated region
    $region42: #{tpu_custom_call.1} parent=1 // pred_check
      _
    $region43: #{tpu_custom_call.1} parent=1 // pred_check_branch
      %57 = sbr.rel (0) target = $region45
    $region44: #{tpu_custom_call.1} parent=1 // pred_region
      %58 = dma.done [#allocation6], 2048
    $region45: #{tpu_custom_call.1} parent=1 // pred_fallthru
      _
    %v59 = vld [vmem:[#allocation3] sm:$0xff]
    %v60 = vld [vmem:[%s2] sm:$0xff]
    %v61 = vld [vmem:[%s2 + $0x8] sm:$0xff]
    %v62 = vld [vmem:[%s1] sm:$0xff]
    %v63 = vld [vmem:[%s3] sm:$0xf]
    %vm64 = vcmask 31744
    %v66 = vsel %vm64, %v62, 0
    %vm68 = vcmask 1043456
    %v70 = vsel %vm68, %v63, 0
    %72 = vmatprep.subr.mxu0 0.0
    %73 = vmatpush1.msra.mxu0 %v70
    %74 = vmatprep.subr.mxu0 0.0
    %75 = vmatpush1.msra.mxu0 0.0
    %76 = vmatprep.subr.mxu0 0.0
    %77 = vmatpush1.msra.mxu0 0.0
    %78 = vmatprep.subr.mxu0 0.0
    %79 = vmatpush1.msra.mxu0 0.0
    %80 = vmatprep.subr.mxu0 0.0
    %81 = vmatpush1.msra.mxu0 0.0
    %82 = vmatprep.subr.mxu0 0.0
    %83 = vmatpush1.msra.mxu0 0.0
    %84 = vmatprep.subr.mxu0 0.0
    %85 = vmatpush1.msra.mxu0 0.0
    %86 = vmatprep.subr.mxu0 0.0
    %87 = vmatpush1.msra.mxu0 0.0
    %88 = vmatprep.subr.mxu0 0.0
    %89 = vmatpush1.msra.mxu0 0.0
    %90 = vmatprep.subr.mxu0 0.0
    %91 = vmatpush1.msra.mxu0 0.0
    %92 = vmatprep.subr.mxu0 0.0
    %93 = vmatpush1.msra.mxu0 0.0
    %94 = vmatprep.subr.mxu0 0.0
    %95 = vmatpush1.msra.mxu0 0.0
    %96 = vmatprep.subr.mxu0 0.0
    %97 = vmatpush1.msra.mxu0 0.0
    %98 = vmatprep.subr.mxu0 0.0
    %99 = vmatpush1.msra.mxu0 0.0
    %100 = vmatprep.subr.mxu0 0.0
    %101 = vmatpush1.msra.mxu0 0.0
    %102 = vmatprep.subr.mxu0 0.0
    %103 = vmatpush1.msra.mxu0 0.0
    %104 = vmatprep.subr.mxu0 0.0
    %105 = vmatpush1.msra.mxu0 0.0
    %106 = vmatprep.subr.mxu0 0.0
    %107 = vmatpush1.msra.mxu0 0.0
    %108 = vmatprep.subr.mxu0 0.0
    %109 = vmatpush1.msra.mxu0 0.0
    %110 = vmatprep.subr.mxu0 0.0
    %111 = vmatpush1.msra.mxu0 0.0
    %112 = vmatprep.subr.mxu0 0.0
    %113 = vmatpush1.msra.mxu0 0.0
    %114 = vmatprep.subr.mxu0 0.0
    %115 = vmatpush1.msra.mxu0 0.0
    %116 = vmatprep.subr.mxu0 0.0
    %117 = vmatpush1.msra.mxu0 0.0
    %118 = vmatprep.subr.mxu0 0.0
    %119 = vmatpush1.msra.mxu0 0.0
    %120 = vmatprep.subr.mxu0 0.0
    %121 = vmatpush1.msra.mxu0 0.0
    %122 = vmatprep.subr.mxu0 0.0
    %123 = vmatpush1.msra.mxu0 0.0
    %124 = vmatprep.subr.mxu0 0.0
    %125 = vmatpush1.msra.mxu0 0.0
    %126 = vmatprep.subr.mxu0 0.0
    %127 = vmatpush1.msra.mxu0 0.0
    %128 = vmatprep.subr.mxu0 0.0
    %129 = vmatpush1.msra.mxu0 0.0
    %130 = vmatprep.subr.mxu0 0.0
    %131 = vmatpush1.msra.mxu0 0.0
    %132 = vmatprep.subr.mxu0 0.0
    %133 = vmatpush1.msra.mxu0 0.0
    %134 = vmatprep.subr.mxu0 0.0
    %135 = vmatpush1.msra.mxu0 0.0
    %136 = vmatprep.mubr.f32.mxu0 0.0
    %137 = vmatmul.mubr.f32.gmra.mrb[0].mxu0 %v66
    %v138 = vpop.f32.mrb[0].mxu0
    %v139 = vadd.f32 0.0, %v138
    %v140 = vpop.f32.mrb[0].mxu0
    %141 = vdwg.mxu0
    %vm142 = vcmask 130048
    %v144 = vsel %vm142, %v59, 0
    %146 = vmatprep.subr.mxu0 0.0
    %147 = vmatpush1.msra.mxu0 %v60
    %148 = vmatprep.subr.mxu0 0.0
    %149 = vmatpush1.msra.mxu0 %v61
    %150 = vmatprep.subr.mxu0 0.0
    %151 = vmatpush1.msra.mxu0 0.0
    %152 = vmatprep.subr.mxu0 0.0
    %153 = vmatpush1.msra.mxu0 0.0
    %154 = vmatprep.subr.mxu0 0.0
    %155 = vmatpush1.msra.mxu0 0.0
    %156 = vmatprep.subr.mxu0 0.0
    %157 = vmatpush1.msra.mxu0 0.0
    %158 = vmatprep.subr.mxu0 0.0
    %159 = vmatpush1.msra.mxu0 0.0
    %160 = vmatprep.subr.mxu0 0.0
    %161 = vmatpush1.msra.mxu0 0.0
    %162 = vmatprep.subr.mxu0 0.0
    %163 = vmatpush1.msra.mxu0 0.0
    %164 = vmatprep.subr.mxu0 0.0
    %165 = vmatpush1.msra.mxu0 0.0
    %166 = vmatprep.subr.mxu0 0.0
    %167 = vmatpush1.msra.mxu0 0.0
    %168 = vmatprep.subr.mxu0 0.0
    %169 = vmatpush1.msra.mxu0 0.0
    %170 = vmatprep.subr.mxu0 0.0
    %171 = vmatpush1.msra.mxu0 0.0
    %172 = vmatprep.subr.mxu0 0.0
    %173 = vmatpush1.msra.mxu0 0.0
    %174 = vmatprep.subr.mxu0 0.0
    %175 = vmatpush1.msra.mxu0 0.0
    %176 = vmatprep.subr.mxu0 0.0
    %177 = vmatpush1.msra.mxu0 0.0
    %178 = vmatprep.subr.mxu0 0.0
    %179 = vmatpush1.msra.mxu0 0.0
    %180 = vmatprep.subr.mxu0 0.0
    %181 = vmatpush1.msra.mxu0 0.0
    %182 = vmatprep.subr.mxu0 0.0
    %183 = vmatpush1.msra.mxu0 0.0
    %184 = vmatprep.subr.mxu0 0.0
    %185 = vmatpush1.msra.mxu0 0.0
    %186 = vmatprep.subr.mxu0 0.0
    %187 = vmatpush1.msra.mxu0 0.0
    %188 = vmatprep.subr.mxu0 0.0
    %189 = vmatpush1.msra.mxu0 0.0
    %190 = vmatprep.subr.mxu0 0.0
    %191 = vmatpush1.msra.mxu0 0.0
    %192 = vmatprep.subr.mxu0 0.0
    %193 = vmatpush1.msra.mxu0 0.0
    %194 = vmatprep.subr.mxu0 0.0
    %195 = vmatpush1.msra.mxu0 0.0
    %196 = vmatprep.subr.mxu0 0.0
    %197 = vmatpush1.msra.mxu0 0.0
    %198 = vmatprep.subr.mxu0 0.0
    %199 = vmatpush1.msra.mxu0 0.0
    %200 = vmatprep.subr.mxu0 0.0
    %201 = vmatpush1.msra.mxu0 0.0
    %202 = vmatprep.subr.mxu0 0.0
    %203 = vmatpush1.msra.mxu0 0.0
    %204 = vmatprep.subr.mxu0 0.0
    %205 = vmatpush1.msra.mxu0 0.0
    %206 = vmatprep.subr.mxu0 0.0
    %207 = vmatpush1.msra.mxu0 0.0
    %208 = vmatprep.subr.mxu0 0.0
    %209 = vmatpush1.msra.mxu0 0.0
    %210 = vmatprep.mubr.f32.mxu0 0.0
    %211 = vmatmul.mubr.f32.gmra.mrb[0].mxu0 %v144
    %v212 = vpop.f32.mrb[0].mxu0
    %v213 = vadd.f32 %v139, %v212
    %v214 = vpop.f32.mrb[0].mxu0
    %215 = vdwg.mxu0
    %v216 = vld [vmem:[%s4] sm:$0x1]
    %v218 = vlaneseq
    %v219 = vshrl.u32 %v218, 7
    %v220 = vsub.s32 0, %v219
    %v221 = vrot.slane %v216, %v220
    %v223 = vadd.f32 %v213, %v221
    %v224 = vmax.f32 %v223, 0.0
    %v225 = vld [vmem:[#allocation5] sm:$0xff]
    %v226 = vld [vmem:[#allocation5 + $0x8] sm:$0xff]
    %v227 = vld [vmem:[#allocation5 + $0x10] sm:$0xff]
    %v228 = vld [vmem:[#allocation5 + $0x18] sm:$0xff]
    %v229 = vld [vmem:[#allocation5 + $0x20] sm:$0xff]
    %v230 = vld [vmem:[#allocation5 + $0x28] sm:$0xff]
    %v231 = vld [vmem:[#allocation5 + $0x30] sm:$0xff]
    %v232 = vld [vmem:[#allocation5 + $0x38] sm:$0xff]
    %v233 = vld [vmem:[#allocation5 + $0x40] sm:$0xff]
    %v234 = vld [vmem:[#allocation5 + $0x48] sm:$0xff]
    %v235 = vld [vmem:[#allocation5 + $0x50] sm:$0xff]
    %v236 = vld [vmem:[#allocation5 + $0x58] sm:$0xff]
    %v237 = vld [vmem:[#allocation5 + $0x60] sm:$0xff]
    %v238 = vld [vmem:[#allocation5 + $0x68] sm:$0xff]
    %v239 = vld [vmem:[#allocation5 + $0x70] sm:$0xff]
    %v240 = vld [vmem:[#allocation5 + $0x78] sm:$0xff]
    %v241 = vld [vmem:[%s6] sm:$0x1]
    %v243 = vlaneseq
    %v244 = vshrl.u32 %v243, 7
    %v245 = vsub.s32 0, %v244
    %v246 = vrot.slane %v241, %v245
    %248 = vmatprep.subr.mxu0 0.0
    %249 = vmatpush1.msra.mxu0 %v225
    %250 = vmatprep.subr.mxu0 0.0
    %251 = vmatpush1.msra.mxu0 %v226
    %252 = vmatprep.subr.mxu0 0.0
    %253 = vmatpush1.msra.mxu0 %v227
    %254 = vmatprep.subr.mxu0 0.0
    %255 = vmatpush1.msra.mxu0 %v228
    %256 = vmatprep.subr.mxu0 0.0
    %257 = vmatpush1.msra.mxu0 %v229
    %258 = vmatprep.subr.mxu0 0.0
    %259 = vmatpush1.msra.mxu0 %v230
    %260 = vmatprep.subr.mxu0 0.0
    %261 = vmatpush1.msra.mxu0 %v231
    %262 = vmatprep.subr.mxu0 0.0
    %263 = vmatpush1.msra.mxu0 %v232
    %264 = vmatprep.subr.mxu0 0.0
    %265 = vmatpush1.msra.mxu0 %v233
    %266 = vmatprep.subr.mxu0 0.0
    %267 = vmatpush1.msra.mxu0 %v234
    %268 = vmatprep.subr.mxu0 0.0
    %269 = vmatpush1.msra.mxu0 %v235
    %270 = vmatprep.subr.mxu0 0.0
    %271 = vmatpush1.msra.mxu0 %v236
    %272 = vmatprep.subr.mxu0 0.0
    %273 = vmatpush1.msra.mxu0 %v237
    %274 = vmatprep.subr.mxu0 0.0
    %275 = vmatpush1.msra.mxu0 %v238
    %276 = vmatprep.subr.mxu0 0.0
    %277 = vmatpush1.msra.mxu0 %v239
    %278 = vmatprep.subr.mxu0 0.0
    %279 = vmatpush1.msra.mxu0 %v240
    %280 = vmatprep.subr.mxu0 0.0
    %281 = vmatpush1.msra.mxu0 0.0
    %282 = vmatprep.subr.mxu0 0.0
    %283 = vmatpush1.msra.mxu0 0.0
    %284 = vmatprep.subr.mxu0 0.0
    %285 = vmatpush1.msra.mxu0 0.0
    %286 = vmatprep.subr.mxu0 0.0
    %287 = vmatpush1.msra.mxu0 0.0
    %288 = vmatprep.subr.mxu0 0.0
    %289 = vmatpush1.msra.mxu0 0.0
    %290 = vmatprep.subr.mxu0 0.0
    %291 = vmatpush1.msra.mxu0 0.0
    %292 = vmatprep.subr.mxu0 0.0
    %293 = vmatpush1.msra.mxu0 0.0
    %294 = vmatprep.subr.mxu0 0.0
    %295 = vmatpush1.msra.mxu0 0.0
    %296 = vmatprep.subr.mxu0 0.0
    %297 = vmatpush1.msra.mxu0 0.0
    %298 = vmatprep.subr.mxu0 0.0
    %299 = vmatpush1.msra.mxu0 0.0
    %300 = vmatprep.subr.mxu0 0.0
    %301 = vmatpush1.msra.mxu0 0.0
    %302 = vmatprep.subr.mxu0 0.0
    %303 = vmatpush1.msra.mxu0 0.0
    %304 = vmatprep.subr.mxu0 0.0
    %305 = vmatpush1.msra.mxu0 0.0
    %306 = vmatprep.subr.mxu0 0.0
    %307 = vmatpush1.msra.mxu0 0.0
    %308 = vmatprep.subr.mxu0 0.0
    %309 = vmatpush1.msra.mxu0 0.0
    %310 = vmatprep.subr.mxu0 0.0
    %311 = vmatpush1.msra.mxu0 0.0
    %312 = vmatprep.mubr.f32.mxu0 0.0
    %313 = vmatmul.mubr.f32.gmra.mrb[0].mxu0 %v224
    %v314 = vpop.f32.mrb[0].mxu0
    %v315 = vadd.f32 %v246, %v314
    %v316 = vpop.f32.mrb[0].mxu0
    %317 = vdwg.mxu0
    %v318 = vmax.f32 %v315, 0.0
    %v319 = vld [vmem:[%s7] sm:$0x1]
    %v321 = vlaneseq
    %v322 = vshrl.u32 %v321, 7
    %v323 = vsub.s32 0, %v322
    %v324 = vrot.slane %v319, %v323
    %v326 = vmul.f32 %v318, %v324
    %327 = vadd.xlane.f32.xlu0 %v326
    %v328 = vpop.xlane.xlu0 %327
    %s329 = sld [smem:[#allocation2]]
    %v330 = vstv %s329
    %v331 = vadd.f32 %v328, %v330
    %vm332 = vcmask 7168
    %333 = vst.msk [vmem:[%s9] sm:$0xff] %vm332, %v331
    // Predicated region
    $region46: #{tpu_custom_call.1} parent=1 // pred_check
      _
    $region47: #{tpu_custom_call.1} parent=1 // pred_check_branch
      %335 = sbr.rel (0) target = $region49
    $region48: #{tpu_custom_call.1} parent=1 // pred_region
      _
    $region49: #{tpu_custom_call.1} parent=1 // pred_fallthru
      _
    // Predicated region
    $region50: #{tpu_custom_call.1} parent=1 // pred_check
      _
    $region51: #{tpu_custom_call.1} parent=1 // pred_check_branch
      %337 = sbr.rel (0) target = $region53
    $region52: #{tpu_custom_call.1} parent=1 // pred_region
      _
    $region53: #{tpu_custom_call.1} parent=1 // pred_fallthru
      _
    %338 = vsyncpa [#allocation4], 1
    %339 = vsyncpa [#allocation6], 1

</llo_original>
